<compile_context>
chip_gen: v7x
topology: tpu7x:2x2x1
jax: 0.10.0
libtpu: 0.0.40
codegen_flags: <defaults>
</compile_context>

<pallas_src>
import functools

import jax
import jax.numpy as jnp
from jax import lax
from jax.experimental import pallas as pl
from jax.experimental.pallas import tpu as pltpu

_LANE = 128
_VMEM_LIMIT_BYTES = 48 * 1024 * 1024           # safe on v5e/v6e (128 MiB) and v7x (64 MiB)
_DEFAULT_BLOCK_BUDGET_BYTES = 7 * 1024 * 1024  # per-direction block; x2 dirs x2 buffers < 32 MiB


def _round_up(v, m):
    return (v + m - 1) // m * m


# --------------------------- SEBlock Pallas kernels --------------------------

def _se_fused_kernel(inv_hw, x_ref, w1t_ref, b1_ref, w2t_ref, b2_ref, o_ref):
    # x_ref: (Bt, C, HWp); w1t: (C, C_r); b1: (1, C_r); w2t: (C_r, C); b2: (1, C)
    x = x_ref[...]
    # global average pool: f32 reduction, divide by the TRUE H*W (padding is zeros)
    pooled = jnp.sum(x.astype(jnp.float32), axis=-1) * inv_hw        # (Bt, C)
    h = jnp.dot(pooled, w1t_ref[...], preferred_element_type=jnp.float32) + b1_ref[...]
    h = jnp.maximum(h, 0.0)
    s = jnp.dot(h, w2t_ref[...], preferred_element_type=jnp.float32) + b2_ref[...]
    s = jax.nn.sigmoid(s)                                            # (Bt, C)
    # rescale in the input dtype (no materialized f32 copy of the tile)
    o_ref[...] = x * s.astype(x.dtype)[:, :, None]


def _se_pool_kernel(x_ref, sum_ref):
    # x_ref: (1, C, THW); sum_ref: (1, C, 1) resident accumulator across HW tiles
    @pl.when(pl.program_id(1) == 0)
    def _():
        sum_ref[...] = jnp.zeros_like(sum_ref)
    sum_ref[...] += jnp.sum(x_ref[...].astype(jnp.float32), axis=-1, keepdims=True)


def _se_apply_kernel(x_ref, s_ref, o_ref):
    # x_ref: (1, C, THW); s_ref: (1, C, 1) pre-computed sigmoid scale in x's dtype
    o_ref[...] = x_ref[...] * s_ref[...]


def se_block(x, w1, b1, w2, b2, *,
             block_budget_bytes=_DEFAULT_BLOCK_BUDGET_BYTES,
             vmem_limit_bytes=_VMEM_LIMIT_BYTES):
    """SEBlock forward.  x: (N,C,H,W);  w1: (C_r,C,1,1);  w2: (C,C_r,1,1)."""
    N, C, H, W = x.shape
    C_r = w1.shape[0]
    HW = H * W
    HWp = _round_up(HW, _LANE)
    itemsize = jnp.dtype(x.dtype).itemsize

    x_flat = x.reshape(N, C, HW)
    if HWp != HW:
        # pad lanes to a 128 multiple so stores are lane-dense; the mean below
        # divides by the true HW so the zero padding does not bias the pooling.
        x_flat = jnp.pad(x_flat, ((0, 0), (0, 0), (0, HWp - HW)))

    # hoist weight casts / reshapes out of the kernel (1x1 conv == matmul)
    w1t = w1.reshape(C_r, C).T.astype(jnp.float32)          # (C, C_r)
    w2t = w2.reshape(C, C_r).T.astype(jnp.float32)          # (C_r, C)
    b1r = (jnp.zeros((C_r,), jnp.float32) if b1 is None
           else b1.astype(jnp.float32)).reshape(1, C_r)
    b2r = (jnp.zeros((C,), jnp.float32) if b2 is None
           else b2.astype(jnp.float32)).reshape(1, C)

    elem_block_bytes = C * HWp * itemsize

    if elem_block_bytes <= block_budget_bytes:
        # ---------------- fused single-pass path ----------------
        # largest batch tile that fits the budget, preferring >= 2 grid steps so
        # both v7x TensorCores are used when N >= 2.
        divisors = [d for d in range(1, N + 1) if N % d == 0]
        fitting = [d for d in divisors if d * elem_block_bytes <= block_budget_bytes]
        multi = [d for d in fitting if N // d >= 2]
        bt = max(multi) if multi else max(fitting)

        out = pl.pallas_call(
            functools.partial(_se_fused_kernel, 1.0 / HW),
            out_shape=jax.ShapeDtypeStruct((N, C, HWp), x.dtype),
            grid=(N // bt,),
            in_specs=[
                pl.BlockSpec((bt, C, HWp), lambda b: (b, 0, 0)),
                pl.BlockSpec((C, C_r), lambda b: (0, 0)),
                pl.BlockSpec((1, C_r), lambda b: (0, 0)),
                pl.BlockSpec((C_r, C), lambda b: (0, 0)),
                pl.BlockSpec((1, C), lambda b: (0, 0)),
            ],
            out_specs=pl.BlockSpec((bt, C, HWp), lambda b: (b, 0, 0)),
            input_output_aliases={0: 0},
            compiler_params=pltpu.CompilerParams(
                dimension_semantics=("parallel",),
                vmem_limit_bytes=vmem_limit_bytes),
        )(x_flat, w1t, b1r, w2t, b2r)
    else:
        # ---------------- two-pass HW-tiled path (large images / v7x VMEM) ----------------
        n_lane_tiles = HWp // _LANE
        lane_budget = max(1, block_budget_bytes // (C * _LANE * itemsize))
        tile_divs = [d for d in range(1, n_lane_tiles + 1)
                     if n_lane_tiles % d == 0 and d <= lane_budget]
        thw = (max(tile_divs) if tile_divs else 1) * _LANE
        T = HWp // thw

        # pass 1: per-batch channel sums (reduction axis last / arbitrary)
        sums = pl.pallas_call(
            _se_pool_kernel,
            out_shape=jax.ShapeDtypeStruct((N, C, 1), jnp.float32),
            grid=(N, T),
            in_specs=[pl.BlockSpec((1, C, thw), lambda n, t: (n, 0, t))],
            out_specs=pl.BlockSpec((1, C, 1), lambda n, t: (n, 0, 0)),
            compiler_params=pltpu.CompilerParams(
                dimension_semantics=("parallel", "arbitrary"),
                vmem_limit_bytes=vmem_limit_bytes),
        )(x_flat)

        # tiny squeeze/excite MLP on the pooled vector (negligible vs HBM roofline)
        pooled = sums[:, :, 0] * (1.0 / HW)                          # (N, C) f32
        h = jnp.maximum(pooled @ w1t + b1r, 0.0)
        s = jax.nn.sigmoid(h @ w2t + b2r)                            # (N, C)
        s = s.astype(x.dtype)[:, :, None]                            # (N, C, 1)

        # pass 2: lane-dense broadcast rescale, both grid axes parallel
        out = pl.pallas_call(
            _se_apply_kernel,
            out_shape=jax.ShapeDtypeStruct((N, C, HWp), x.dtype),
            grid=(N, T),
            in_specs=[pl.BlockSpec((1, C, thw), lambda n, t: (n, 0, t)),
                      pl.BlockSpec((1, C, 1), lambda n, t: (n, 0, 0))],
            out_specs=pl.BlockSpec((1, C, thw), lambda n, t: (n, 0, t)),
            input_output_aliases={0: 0},
            compiler_params=pltpu.CompilerParams(
                dimension_semantics=("parallel", "parallel"),
                vmem_limit_bytes=vmem_limit_bytes),
        )(x_flat, s)

    if HWp != HW:
        out = out[:, :, :HW]
    return out.reshape(N, C, H, W)


def reference_se_block(x, w1, b1, w2, b2):
    """Pure-JAX reference of the PyTorch SEBlock forward."""
    C_r = w1.shape[0]
    C = w2.shape[0]
    b1v = jnp.zeros((C_r,), jnp.float32) if b1 is None else b1
    b2v = jnp.zeros((C,), jnp.float32) if b2 is None else b2
    x0 = jnp.mean(x.astype(jnp.float32), axis=(2, 3))                # (N, C)
    x0 = x0 @ w1.reshape(C_r, C).T + b1v
    x0 = jnp.maximum(x0, 0.0)
    x0 = x0 @ w2.reshape(C, C_r).T + b2v
    x0 = jax.nn.sigmoid(x0)
    return x * x0.astype(x.dtype)[:, :, None, None]


# ------------------------------ UNet2 wrapper --------------------------------

def _conv2d(x, w, b, stride=1):
    out = lax.conv_general_dilated(
        x, w, window_strides=(stride, stride), padding='VALID',
        dimension_numbers=('NCHW', 'OIHW', 'NCHW'))
    return out + b[None, :, None, None]


def _conv_transpose2d(x, w, b, stride, padding):
    # w follows the PyTorch ConvTranspose2d layout (C_in, C_out, kH, kW).
    kh, kw = w.shape[2], w.shape[3]
    w_conv = jnp.flip(w, axis=(2, 3)).transpose(1, 0, 2, 3)          # (C_out, C_in, kh, kw)
    out = lax.conv_general_dilated(
        x, w_conv, window_strides=(1, 1),
        padding=[(kh - 1 - padding, kh - 1 - padding),
                 (kw - 1 - padding, kw - 1 - padding)],
        lhs_dilation=(stride, stride),
        dimension_numbers=('NCHW', 'OIHW', 'NCHW'))
    return out + b[None, :, None, None]


def _lrelu(x):
    return jnp.where(x >= 0, x, 0.1 * x)


def _unet_conv(p, x, use_pallas_se):
    z = _lrelu(_conv2d(x, p['w_a'], p['b_a']))
    z = _lrelu(_conv2d(z, p['w_b'], p['b_b']))
    if 'se_w1' in p:
        if use_pallas_se:
            z = se_block(z, p['se_w1'], p['se_b1'], p['se_w2'], p['se_b2'])
        else:
            z = reference_se_block(z, p['se_w1'], p['se_b1'], p['se_w2'], p['se_b2'])
    return z


def unet2_forward(params, x, alpha=1.0, *, use_pallas_se=True):
    """UNet2.forward (deconv=False) with Pallas SE blocks."""
    x1 = _unet_conv(params['conv1'], x, use_pallas_se)
    x2 = _conv2d(x1, params['conv1_down_w'], params['conv1_down_b'], stride=2)
    x1 = x1[:, :, 16:-16, 16:-16]
    x2 = _lrelu(x2)
    x2 = _unet_conv(params['conv2'], x2, use_pallas_se)
    x3 = _conv2d(x2, params['conv2_down_w'], params['conv2_down_b'], stride=2)
    x2 = x2[:, :, 4:-4, 4:-4]
    x3 = _lrelu(x3)
    x3 = _unet_conv(params['conv3'], x3, use_pallas_se)
    x3 = _conv_transpose2d(x3, params['conv3_up_w'], params['conv3_up_b'], stride=2, padding=0)
    x3 = _lrelu(x3)
    x4 = _unet_conv(params['conv4'], x2 + x3, use_pallas_se)
    x4 = x4 * alpha
    x4 = _conv_transpose2d(x4, params['conv4_up_w'], params['conv4_up_b'], stride=2, padding=0)
    x4 = _lrelu(x4)
    x5 = _conv2d(x1 + x4, params['conv5_w'], params['conv5_b'])
    x5 = _lrelu(x5)
    z = _conv2d(x5, params['conv_bottom_w'], params['conv_bottom_b'])
    return z


# ------------------------------- param init ----------------------------------

def _conv_params(key, out_ch, in_ch, k):
    wkey, bkey = jax.random.split(key)
    fan_out = out_ch * k * k
    w = jax.random.normal(wkey, (out_ch, in_ch, k, k), jnp.float32) * (2.0 / fan_out) ** 0.5
    b = jax.random.normal(bkey, (out_ch,), jnp.float32) * 0.01
    return w, b


def _convT_params(key, in_ch, out_ch, k):
    wkey, bkey = jax.random.split(key)
    fan_out = out_ch * k * k
    w = jax.random.normal(wkey, (in_ch, out_ch, k, k), jnp.float32) * (2.0 / fan_out) ** 0.5
    b = jax.random.normal(bkey, (out_ch,), jnp.float32) * 0.01
    return w, b


def _unet_conv_params(key, in_ch, mid_ch, out_ch, se):
    keys = jax.random.split(key, 4)
    p = {}
    p['w_a'], p['b_a'] = _conv_params(keys[0], mid_ch, in_ch, 3)
    p['w_b'], p['b_b'] = _conv_params(keys[1], out_ch, mid_ch, 3)
    if se:
        cr = out_ch // 8
        p['se_w1'], p['se_b1'] = _conv_params(keys[2], cr, out_ch, 1)
        p['se_w2'], p['se_b2'] = _conv_params(keys[3], out_ch, cr, 1)
    return p


def init_unet2_params(key, in_channels, out_channels):
    ks = jax.random.split(key, 10)
    params = {
        'conv1': _unet_conv_params(ks[0], in_channels, 32, 64, se=False),
        'conv2': _unet_conv_params(ks[1], 64, 64, 128, se=True),
        'conv3': _unet_conv_params(ks[2], 128, 256, 128, se=True),
        'conv4': _unet_conv_params(ks[3], 128, 64, 64, se=True),
    }
    params['conv1_down_w'], params['conv1_down_b'] = _conv_params(ks[4], 64, 64, 2)
    params['conv2_down_w'], params['conv2_down_b'] = _conv_params(ks[5], 128, 128, 2)
    params['conv3_up_w'], params['conv3_up_b'] = _convT_params(ks[6], 128, 128, 2)
    params['conv4_up_w'], params['conv4_up_b'] = _convT_params(ks[7], 64, 64, 2)
    params['conv5_w'], params['conv5_b'] = _conv_params(ks[8], 64, 64, 3)
    # deconv=False branch of UNet2: plain 3x3 conv bottom
    params['conv_bottom_w'], params['conv_bottom_b'] = _conv_params(ks[9], out_channels, 64, 3)
    return params


# ----------------------------------- demo ------------------------------------

if __name__ == "__main__":
    key = jax.random.PRNGKey(0)
    (k_params, k_x, k_se_x, k_se_w1, k_se_b1,
     k_se_w2, k_se_b2, k_tiled) = jax.random.split(key, 8)

    # 1) standalone SEBlock, fused single-pass path (batch-tiled, lane-dense)
    N, C, H, W = 2, 32, 16, 16
    C_r = C // 8
    x_se = jax.random.normal(k_se_x, (N, C, H, W), jnp.float32)
    w1 = jax.random.normal(k_se_w1, (C_r, C, 1, 1), jnp.float32) * (1.0 / C) ** 0.5
    b1 = jax.random.normal(k_se_b1, (C_r,), jnp.float32) * 0.1
    w2 = jax.random.normal(k_se_w2, (C, C_r, 1, 1), jnp.float32) * (1.0 / C_r) ** 0.5
    b2 = jax.random.normal(k_se_b2, (C,), jnp.float32) * 0.1

    out_fused = jax.jit(se_block)(x_se, w1, b1, w2, b2)
    jax.block_until_ready(out_fused)
    ref_se = reference_se_block(x_se, w1, b1, w2, b2)
    assert out_fused.shape == x_se.shape
    assert jnp.allclose(out_fused, ref_se, atol=1e-4, rtol=1e-4)

    # 2) standalone SEBlock, forced two-pass HW-tiled path (v7x big-image path)
    #    with a non-128-multiple HW to exercise lane padding + true-HW mean.
    x_t = jax.random.normal(k_tiled, (1, C, 20, 20), jnp.float32)
    out_tiled = jax.jit(functools.partial(se_block, block_budget_bytes=4096))(
        x_t, w1, b1, w2, b2)
    jax.block_until_ready(out_tiled)
    ref_t = reference_se_block(x_t, w1, b1, w2, b2)
    assert jnp.allclose(out_tiled, ref_t, atol=1e-4, rtol=1e-4)

    # 3) full UNet2 forward (deconv=False) with Pallas SE blocks vs pure-JAX SE
    in_ch, out_ch = 3, 3
    Hx = Wx = 44   # smallest spatial size compatible with UNet2's fixed crops
    params = init_unet2_params(k_params, in_ch, out_ch)
    x = jax.random.normal(k_x, (2, in_ch, Hx, Wx), jnp.float32)

    unet_pallas = jax.jit(functools.partial(unet2_forward, use_pallas_se=True))
    unet_ref = jax.jit(functools.partial(unet2_forward, use_pallas_se=False))
    z = unet_pallas(params, x)
    jax.block_until_ready(z)
    z_ref = unet_ref(params, x)
    assert z.shape == (2, out_ch, Hx - 40, Wx - 40)
    assert jnp.allclose(z, z_ref, atol=1e-3, rtol=1e-3)

    print("KERNEL_OK")
</pallas_src>

<mosaic_0001>
module attributes {stable_mosaic.version = 11 : i64} {
  func.func @_se_fused_kernel(%arg0: i32, %arg1: memref<1x32x256xf32, #tpu.memory_space<vmem>>, %arg2: memref<32x4xf32, #tpu.memory_space<vmem>>, %arg3: memref<1x4xf32, #tpu.memory_space<vmem>>, %arg4: memref<4x32xf32, #tpu.memory_space<vmem>>, %arg5: memref<1x32xf32, #tpu.memory_space<vmem>>, %arg6: memref<1x32x256xf32, #tpu.memory_space<vmem>>) attributes {dimension_semantics = [#tpu.dimension_semantics<parallel>], iteration_bounds = array<i64: 2>, scalar_prefetch = 0 : i64, scratch_operands = 0 : i64, tpu.core_type = #tpu.core_type<tc>, window_params = [{transform_indices = @transform_0, window_bounds = array<i64: 1, 32, 256>}, {pipeline_mode = #tpu.pipeline_mode<synchronous>, transform_indices = @transform_1, window_bounds = array<i64: 32, 4>}, {pipeline_mode = #tpu.pipeline_mode<synchronous>, transform_indices = @transform_2, window_bounds = array<i64: 1, 4>}, {pipeline_mode = #tpu.pipeline_mode<synchronous>, transform_indices = @transform_3, window_bounds = array<i64: 4, 32>}, {pipeline_mode = #tpu.pipeline_mode<synchronous>, transform_indices = @transform_4, window_bounds = array<i64: 1, 32>}, {transform_indices = @transform_5, window_bounds = array<i64: 1, 32, 256>}]} {
    %c0 = arith.constant 0 : index
    %c0_0 = arith.constant 0 : index
    %c0_1 = arith.constant 0 : index
    %0 = vector.load %arg1[%c0, %c0_0, %c0_1] : memref<1x32x256xf32, #tpu.memory_space<vmem>>, vector<1x32x256xf32>
    %cst = arith.constant dense<0.000000e+00> : vector<1x32xf32>
    %1 = vector.multi_reduction <add>, %0, %cst [2] : vector<1x32x256xf32> to vector<1x32xf32>
    %cst_2 = arith.constant 3.906250e-03 : f32
    %2 = vector.broadcast %cst_2 : f32 to vector<1x32xf32>
    %3 = arith.mulf %1, %2 : vector<1x32xf32>
    %c0_3 = arith.constant 0 : index
    %c0_4 = arith.constant 0 : index
    %4 = vector.load %arg2[%c0_3, %c0_4] : memref<32x4xf32, #tpu.memory_space<vmem>>, vector<32x4xf32>
    %cst_5 = arith.constant dense<0.000000e+00> : vector<1x4xf32>
    %5 = tpu.matmul %3, %4, %cst_5 {dimension_numbers = #tpu.dot_dimension_numbers<[1], [0], [0], [1], [0, 0, 1, 1], [], []>} : vector<1x32xf32>, vector<32x4xf32>, vector<1x4xf32> -> vector<1x4xf32>
    %c0_6 = arith.constant 0 : index
    %c0_7 = arith.constant 0 : index
    %6 = vector.load %arg3[%c0_6, %c0_7] : memref<1x4xf32, #tpu.memory_space<vmem>>, vector<1x4xf32>
    %7 = arith.addf %5, %6 : vector<1x4xf32>
    %cst_8 = arith.constant 0.000000e+00 : f32
    %8 = vector.broadcast %cst_8 : f32 to vector<1x4xf32>
    %9 = arith.maximumf %7, %8 : vector<1x4xf32>
    %c0_9 = arith.constant 0 : index
    %c0_10 = arith.constant 0 : index
    %10 = vector.load %arg4[%c0_9, %c0_10] : memref<4x32xf32, #tpu.memory_space<vmem>>, vector<4x32xf32>
    %cst_11 = arith.constant dense<0.000000e+00> : vector<1x32xf32>
    %11 = tpu.matmul %9, %10, %cst_11 {dimension_numbers = #tpu.dot_dimension_numbers<[1], [0], [0], [1], [0, 0, 1, 1], [], []>} : vector<1x4xf32>, vector<4x32xf32>, vector<1x32xf32> -> vector<1x32xf32>
    %c0_12 = arith.constant 0 : index
    %c0_13 = arith.constant 0 : index
    %12 = vector.load %arg5[%c0_12, %c0_13] : memref<1x32xf32, #tpu.memory_space<vmem>>, vector<1x32xf32>
    %13 = arith.addf %11, %12 : vector<1x32xf32>
    %14 = arith.negf %13 : vector<1x32xf32>
    %15 = math.exp %14 : vector<1x32xf32>
    %cst_14 = arith.constant 1.000000e+00 : f32
    %16 = vector.broadcast %cst_14 : f32 to vector<1x32xf32>
    %17 = arith.addf %16, %15 : vector<1x32xf32>
    %18 = arith.divf %16, %17 : vector<1x32xf32>
    %19 = vector.shape_cast %18 : vector<1x32xf32> to vector<1x32x1xf32>
    %20 = vector.broadcast %19 : vector<1x32x1xf32> to vector<1x32x256xf32>
    %21 = arith.mulf %0, %20 : vector<1x32x256xf32>
    %c0_15 = arith.constant 0 : index
    %c0_16 = arith.constant 0 : index
    %c0_17 = arith.constant 0 : index
    %22 = vector.load %arg6[%c0_15, %c0_16, %c0_17] : memref<1x32x256xf32, #tpu.memory_space<vmem>>, vector<1x32x256xf32>
    tpu.vector_store %arg6[%c0_15, %c0_16, %c0_17], %21 {strides = array<i32>} : memref<1x32x256xf32, #tpu.memory_space<vmem>>, vector<1x32x256xf32>,
    return
  }
  func.func @transform_0(%arg0: i32) -> (i32, i32, i32) {
    %c0_i32 = arith.constant 0 : i32
    %c0_i32_0 = arith.constant 0 : i32
    %c0_i32_1 = arith.constant 0 : i32
    return %arg0, %c0_i32, %c0_i32_0 : i32, i32, i32
  }
  func.func @transform_1(%arg0: i32) -> (i32, i32) {
    %c0_i32 = arith.constant 0 : i32
    %c0_i32_0 = arith.constant 0 : i32
    %c0_i32_1 = arith.constant 0 : i32
    return %c0_i32, %c0_i32_0 : i32, i32
  }
  func.func @transform_2(%arg0: i32) -> (i32, i32) {
    %c0_i32 = arith.constant 0 : i32
    %c0_i32_0 = arith.constant 0 : i32
    %c0_i32_1 = arith.constant 0 : i32
    return %c0_i32, %c0_i32_0 : i32, i32
  }
  func.func @transform_3(%arg0: i32) -> (i32, i32) {
    %c0_i32 = arith.constant 0 : i32
    %c0_i32_0 = arith.constant 0 : i32
    %c0_i32_1 = arith.constant 0 : i32
    return %c0_i32, %c0_i32_0 : i32, i32
  }
  func.func @transform_4(%arg0: i32) -> (i32, i32) {
    %c0_i32 = arith.constant 0 : i32
    %c0_i32_0 = arith.constant 0 : i32
    %c0_i32_1 = arith.constant 0 : i32
    return %c0_i32, %c0_i32_0 : i32, i32
  }
  func.func @transform_5(%arg0: i32) -> (i32, i32, i32) {
    %c0_i32 = arith.constant 0 : i32
    %c0_i32_0 = arith.constant 0 : i32
    %c0_i32_1 = arith.constant 0 : i32
    return %arg0, %c0_i32, %c0_i32_0 : i32, i32, i32
  }
}

</mosaic_0001>

<llo_original>
// kernel: se_block.1
$region0: #{se_block.1}
  #allocation0 [shape = 'u32[]', space=smem, size = 0x4, offset = 0x4, fixed_abs, tag = 'smem constant byte address 0x4 - core index']
  #allocation1 [shape = 'u32[144,128]{1,0:T(1,128)}', space=vmem, size = 0x12000, scoped, tag = 'internal scratch']
  %s0 = inlined_call_operand.vmem [shape: f32[2,32,256], index: 0, kind: input, shape index: {}, may-alias: {0,5}]
  %s1 = inlined_call_operand.vmem [shape: f32[32,4], index: 1, kind: input, shape index: {}]
  %s2 = inlined_call_operand.vmem [shape: f32[1,4], index: 2, kind: input, shape index: {}]
  %s3 = inlined_call_operand.vmem [shape: f32[4,32], index: 3, kind: input, shape index: {}]
  %s4 = inlined_call_operand.vmem [shape: f32[1,32], index: 4, kind: input, shape index: {}]
  %s5 = inlined_call_operand.vmem [shape: f32[2,32,256], index: 5, kind: output, shape index: {}, may-alias: {0,5}]
  %s6 = sld [smem:[#allocation0]]
  $region53: #{se_block.1} parent=0
    _
  %s8 = ssub.s32 1, %s6
  %s9 = scalar_select 0, %s8, %s6
  loop: start=0, step=1, limit=4
  $region2: #{se_block.1} parent=0 // loop_pre_header
    _
  $region3: #{se_block.1} parent=0 // loop_header
    %s11 = sphi 0, %s15
    %p12 = scmp.ge.s32.totalorder %s11, 4
    %s21 = sphi 0, %s23
    %s24 = sphi 0, %s21
    %s25 = sphi 0, %s24
    %s41 = sphi 0, %s25
    %s45 = sphi 0, %s45
    %s47 = sphi 0, %s45
    %s48 = sphi 0, %s47
    %s62 = sphi 0, %s48
    %s66 = sphi 0, %s66
    %s68 = sphi 0, %s66
    %s69 = sphi 0, %s68
    %s83 = sphi 0, %s69
    %s87 = sphi 0, %s87
    %s89 = sphi 0, %s87
    %s90 = sphi 0, %s89
    %s104 = sphi 0, %s90
    %s108 = sphi 0, %s108
    %s110 = sphi 0, %s108
    %s111 = sphi 0, %s110
    %s125 = sphi 0, %s111
    %s131 = sphi 0, %s133
    %s134 = sphi 0, %s131
    %s135 = sphi 0, %s134
    %s151 = sphi 0, %s135
  $region4: #{se_block.1} parent=0 // loop_header_branch
    %14 = sbr.rel (%p12) target = $region8
  $region5: #{se_block.1} parent=0 // loop_body
    %s16 = ssub.s32 %s11, 1
    %s17 = ssub.s32 %s11, 2
    %s18 = sadd.s32 %s11, 1
    %s19 = ssub.s32 %s11, %s18
    %p20 = scmp.eq.s32.totalorder %s19, 0
    %s22 = sadd.s32 %s21, 1
    %s23 = scalar_select %p20, %s21, %s22
    %p26 = pneg %p20
    %p27 = scmp.eq.s32.totalorder %s11, 1
    %p28 = por %p26, %p27
    %p29 = scmp.ne.s32.totalorder %s21, %s24
    %p30 = scmp.eq.s32.totalorder %s11, 0
    %p31 = por %p29, %p30
    %p32 = scmp.ne.s32.totalorder %s21, %s24
    %p33 = scmp.eq.s32.totalorder %s16, 1
    %p34 = por %p32, %p33
    %p35 = scmp.ne.s32.totalorder %s24, %s25
    %p36 = scmp.eq.s32.totalorder %s16, 0
    %p37 = por %p35, %p36
    %p38 = scmp.ne.s32.totalorder %s24, %s25
    %p39 = scmp.eq.s32.totalorder %s17, 1
    %p40 = por %p38, %p39
    %p42 = scmp.ne.s32.totalorder %s25, %s41
    %p43 = scmp.eq.s32.totalorder %s17, 0
    %p44 = por %p42, %p43
    %s46 = sadd.s32 %s45, 1
    %p49 = scmp.eq.s32.totalorder %s11, 1
    %p50 = scmp.ne.s32.totalorder %s45, %s47
    %p51 = scmp.eq.s32.totalorder %s11, 0
    %p52 = por %p50, %p51
    %p53 = scmp.ne.s32.totalorder %s45, %s47
    %p54 = scmp.eq.s32.totalorder %s16, 1
    %p55 = por %p53, %p54
    %p56 = scmp.ne.s32.totalorder %s47, %s48
    %p57 = scmp.eq.s32.totalorder %s16, 0
    %p58 = por %p56, %p57
    %p59 = scmp.ne.s32.totalorder %s47, %s48
    %p60 = scmp.eq.s32.totalorder %s17, 1
    %p61 = por %p59, %p60
    %p63 = scmp.ne.s32.totalorder %s48, %s62
    %p64 = scmp.eq.s32.totalorder %s17, 0
    %p65 = por %p63, %p64
    %s67 = sadd.s32 %s66, 1
    %p70 = scmp.eq.s32.totalorder %s11, 1
    %p71 = scmp.ne.s32.totalorder %s66, %s68
    %p72 = scmp.eq.s32.totalorder %s11, 0
    %p73 = por %p71, %p72
    %p74 = scmp.ne.s32.totalorder %s66, %s68
    %p75 = scmp.eq.s32.totalorder %s16, 1
    %p76 = por %p74, %p75
    %p77 = scmp.ne.s32.totalorder %s68, %s69
    %p78 = scmp.eq.s32.totalorder %s16, 0
    %p79 = por %p77, %p78
    %p80 = scmp.ne.s32.totalorder %s68, %s69
    %p81 = scmp.eq.s32.totalorder %s17, 1
    %p82 = por %p80, %p81
    %p84 = scmp.ne.s32.totalorder %s69, %s83
    %p85 = scmp.eq.s32.totalorder %s17, 0
    %p86 = por %p84, %p85
    %s88 = sadd.s32 %s87, 1
    %p91 = scmp.eq.s32.totalorder %s11, 1
    %p92 = scmp.ne.s32.totalorder %s87, %s89
    %p93 = scmp.eq.s32.totalorder %s11, 0
    %p94 = por %p92, %p93
    %p95 = scmp.ne.s32.totalorder %s87, %s89
    %p96 = scmp.eq.s32.totalorder %s16, 1
    %p97 = por %p95, %p96
    %p98 = scmp.ne.s32.totalorder %s89, %s90
    %p99 = scmp.eq.s32.totalorder %s16, 0
    %p100 = por %p98, %p99
    %p101 = scmp.ne.s32.totalorder %s89, %s90
    %p102 = scmp.eq.s32.totalorder %s17, 1
    %p103 = por %p101, %p102
    %p105 = scmp.ne.s32.totalorder %s90, %s104
    %p106 = scmp.eq.s32.totalorder %s17, 0
    %p107 = por %p105, %p106
    %s109 = sadd.s32 %s108, 1
    %p112 = scmp.eq.s32.totalorder %s11, 1
    %p113 = scmp.ne.s32.totalorder %s108, %s110
    %p114 = scmp.eq.s32.totalorder %s11, 0
    %p115 = por %p113, %p114
    %p116 = scmp.ne.s32.totalorder %s108, %s110
    %p117 = scmp.eq.s32.totalorder %s16, 1
    %p118 = por %p116, %p117
    %p119 = scmp.ne.s32.totalorder %s110, %s111
    %p120 = scmp.eq.s32.totalorder %s16, 0
    %p121 = por %p119, %p120
    %p122 = scmp.ne.s32.totalorder %s110, %s111
    %p123 = scmp.eq.s32.totalorder %s17, 1
    %p124 = por %p122, %p123
    %p126 = scmp.ne.s32.totalorder %s111, %s125
    %p127 = scmp.eq.s32.totalorder %s17, 0
    %p128 = por %p126, %p127
    %s129 = ssub.s32 %s11, %s18
    %p130 = scmp.eq.s32.totalorder %s129, 0
    %s132 = sadd.s32 %s131, 1
    %s133 = scalar_select %p130, %s131, %s132
    %p136 = pneg %p130
    %p137 = scmp.eq.s32.totalorder %s11, 1
    %p138 = por %p136, %p137
    %p139 = scmp.ne.s32.totalorder %s131, %s134
    %p140 = scmp.eq.s32.totalorder %s11, 0
    %p141 = por %p139, %p140
    %p142 = scmp.ne.s32.totalorder %s131, %s134
    %p143 = scmp.eq.s32.totalorder %s16, 1
    %p144 = por %p142, %p143
    %p145 = scmp.ne.s32.totalorder %s134, %s135
    %p146 = scmp.eq.s32.totalorder %s16, 0
    %p147 = por %p145, %p146
    %p148 = scmp.ne.s32.totalorder %s134, %s135
    %p149 = scmp.eq.s32.totalorder %s17, 1
    %p150 = por %p148, %p149
    %p152 = scmp.ne.s32.totalorder %s135, %s151
    %p153 = scmp.eq.s32.totalorder %s17, 0
    %p154 = por %p152, %p153
    %p155 = scmp.le.s32.totalorder 1, %s11
    %p156 = scmp.lt.s32.totalorder %s11, 3
    %p157 = pnand %p155, %p156
    %p158 = pneg %p157
    // Predicated region
    $region9: #{se_block.1} parent=5 // pred_check
      _
    $region10: #{se_block.1} parent=5 // pred_check_branch
      %160 = sbr.rel (%p157) target = $region12
    $region11: #{se_block.1} parent=5 // pred_region
      %s161 = ssub.s32 %s11, 1
      // Predicated region
      $region13: #{se_block.1} parent=11 // pred_check
        %p162 = pneg %p58
      $region14: #{se_block.1} parent=11 // pred_check_branch
        %164 = sbr.rel (%p162) target = $region16
      $region15: #{se_block.1} parent=11 // pred_region
        _
      $region16: #{se_block.1} parent=11 // pred_fallthru
        _
      // Predicated region
      $region17: #{se_block.1} parent=11 // pred_check
        %p165 = pneg %p79
      $region18: #{se_block.1} parent=11 // pred_check_branch
        %167 = sbr.rel (%p165) target = $region20
      $region19: #{se_block.1} parent=11 // pred_region
        _
      $region20: #{se_block.1} parent=11 // pred_fallthru
        _
      // Predicated region
      $region21: #{se_block.1} parent=11 // pred_check
        %p168 = pneg %p100
      $region22: #{se_block.1} parent=11 // pred_check_branch
        %170 = sbr.rel (%p168) target = $region24
      $region23: #{se_block.1} parent=11 // pred_region
        _
      $region24: #{se_block.1} parent=11 // pred_fallthru
        _
      // Predicated region
      $region25: #{se_block.1} parent=11 // pred_check
        %p171 = pneg %p121
      $region26: #{se_block.1} parent=11 // pred_check_branch
        %173 = sbr.rel (%p171) target = $region28
      $region27: #{se_block.1} parent=11 // pred_region
        _
      $region28: #{se_block.1} parent=11 // pred_fallthru
        _
    $region12: #{se_block.1} parent=5 // pred_fallthru
      _
    %p174 = scmp.lt.s32.totalorder %s11, 2
    // Predicated region
    $region29: #{se_block.1} parent=5 // pred_check
      %p175 = pneg %p174
    $region30: #{se_block.1} parent=5 // pred_check_branch
      %177 = sbr.rel (%p175) target = $region32
    $region31: #{se_block.1} parent=5 // pred_region
      // Predicated region
      $region33: #{se_block.1} parent=31 // pred_check
        %p178 = pneg %p31
      $region34: #{se_block.1} parent=31 // pred_check_branch
        %180 = sbr.rel (%p178) target = $region36
      $region35: #{se_block.1} parent=31 // pred_region
        %p181 = scmp.lt.s32.totalorder %s11, 1
        %s182 = scalar_select %p181, %s11, 1
        %s183 = smul.addr %s182, 8
        %s184 = smul.addr %s183, 8
        %s185 = scalar_lea.vmem %s0, %s184
      $region36: #{se_block.1} parent=31 // pred_fallthru
        _
    $region32: #{se_block.1} parent=5 // pred_fallthru
      _
    %p186 = scmp.le.s32.totalorder 1, %s11
    %p187 = scmp.lt.s32.totalorder %s11, 3
    %p188 = pnand %p186, %p187
    %p189 = pneg %p188
    // Predicated region
    $region37: #{se_block.1} parent=5 // pred_check
      _
    $region38: #{se_block.1} parent=5 // pred_check_branch
      %191 = sbr.rel (%p188) target = $region40
    $region39: #{se_block.1} parent=5 // pred_region
      %s192 = ssub.s32 %s11, 1
      %p193 = scmp.lt.s32.totalorder %s16, 1
      %s194 = scalar_select %p193, %s16, 1
      %s195 = smul.addr %s194, 8
      %s196 = smul.addr %s195, 8
      %s197 = scalar_lea.vmem %s0, %s196
      %p198 = pneg %p37
      %p199 = pneg %p34
      %p200 = pneg %p58
      %p201 = pneg %p55
      %p202 = pneg %p79
      %p203 = pneg %p76
      %p204 = pneg %p100
      %p205 = pneg %p97
      %p206 = pneg %p121
      %p207 = pneg %p118
      %p208 = pneg %p147
      %p209 = pneg %p144
      %p210 = scmp.lt.s32.totalorder %s16, 1
      %s211 = scalar_select %p210, %s16, 1
      %s212 = smul.addr %s211, 8
      %s213 = smul.addr %s212, 8
      %s214 = scalar_lea.vmem %s5, %s213
      %p215 = scmp.lt.s32.totalorder %s16, 1
      %s216 = scalar_select %p215, %s16, 1
      %s217 = smul.addr %s216, 8
      %s218 = smul.addr %s217, 8
      %s219 = scalar_lea.vmem %s0, %s218
      %p220 = scmp.lt.s32.totalorder %s16, 1
      %s221 = scalar_select %p220, %s16, 1
      %s222 = smul.addr %s221, 8
      %s223 = smul.addr %s222, 8
      %s224 = scalar_lea.vmem %s5, %s223
      %v225 = vld [vmem:[%s219] sm:$0xff]
      %v226 = vld [vmem:[%s219 + $0x8] sm:$0xff]
      %v227 = vld [vmem:[%s219 + $0x10] sm:$0xff]
      %v228 = vld [vmem:[%s219 + $0x18] sm:$0xff]
      %v229 = vld [vmem:[%s219 + $0x20] sm:$0xff]
      %v230 = vld [vmem:[%s219 + $0x28] sm:$0xff]
      %v231 = vld [vmem:[%s219 + $0x30] sm:$0xff]
      %v232 = vld [vmem:[%s219 + $0x38] sm:$0xff]
      %v233 = vadd.f32 %v225, %v226
      %234 = vadd.xlane.f32.xlu0 %v233
      %v235 = vpop.xlane.xlu0 %234
      %v236 = vadd.f32 %v227, %v228
      %237 = vadd.xlane.f32.xlu0 %v236
      %v238 = vpop.xlane.xlu0 %237
      %v239 = vadd.f32 %v229, %v230
      %240 = vadd.xlane.f32.xlu0 %v239
      %v241 = vpop.xlane.xlu0 %240
      %v242 = vadd.f32 %v231, %v232
      %243 = vadd.xlane.f32.xlu0 %v242
      %v244 = vpop.xlane.xlu0 %243
      %v245 = vmul.f32 %v235, 0.00390625
      %v246 = vmul.f32 %v238, 0.00390625
      %v247 = vmul.f32 %v241, 0.00390625
      %v248 = vmul.f32 %v244, 0.00390625
      %v249 = vld [vmem:[%s1] sm:$0xff]
      %v250 = vld [vmem:[%s1 + $0x8] sm:$0xff]
      %v251 = vld [vmem:[%s1 + $0x10] sm:$0xff]
      %v252 = vld [vmem:[%s1 + $0x18] sm:$0xff]
      %v253 = vld [vmem:[%s2] sm:$0x1]
      %v258 = vlaneseq
      %v259 = vand.u32 %v258, 127
      %v260 = vlaneseq
      %v261 = vshrl.u32 %v260, 7
      %v262 = vsub.s32 %v259, %v261
      %v263 = vrot.slane %v245, %v262
      %v264 = vadd.s32 %v259, 4294967288
      %v265 = vlaneseq
      %v266 = vshrl.u32 %v265, 7
      %v267 = vsub.s32 %v264, %v266
      %v268 = vrot.slane %v246, %v267
      %vm269 = vcmask 130112
      %v270 = vsel %vm269, %v268, %v263
      %v271 = vadd.s32 %v259, 4294967280
      %v272 = vlaneseq
      %v273 = vshrl.u32 %v272, 7
      %v274 = vsub.s32 %v271, %v273
      %v275 = vrot.slane %v247, %v274
      %vm276 = vcmask 195712
      %v277 = vsel %vm276, %v275, %v270
      %v278 = vadd.s32 %v259, 4294967272
      %v279 = vlaneseq
      %v280 = vshrl.u32 %v279, 7
      %v281 = vsub.s32 %v278, %v280
      %v282 = vrot.slane %v248, %v281
      %vm283 = vcmask 261312
      %v284 = vsel %vm283, %v282, %v277
      %vm285 = vcmask 261120
      %v286 = vsel %vm285, %v284, 0
      %288 = vmatprep.subr.mxu0 0.0
      %289 = vmatpush1.msra.mxu0 %v249
      %290 = vmatprep.subr.mxu0 0.0
      %291 = vmatpush1.msra.mxu0 %v250
      %292 = vmatprep.subr.mxu0 0.0
      %293 = vmatpush1.msra.mxu0 %v251
      %294 = vmatprep.subr.mxu0 0.0
      %295 = vmatpush1.msra.mxu0 %v252
      %296 = vmatprep.subr.mxu0 0.0
      %297 = vmatpush1.msra.mxu0 0.0
      %298 = vmatprep.subr.mxu0 0.0
      %299 = vmatpush1.msra.mxu0 0.0
      %300 = vmatprep.subr.mxu0 0.0
      %301 = vmatpush1.msra.mxu0 0.0
      %302 = vmatprep.subr.mxu0 0.0
      %303 = vmatpush1.msra.mxu0 0.0
      %304 = vmatprep.subr.mxu0 0.0
      %305 = vmatpush1.msra.mxu0 0.0
      %306 = vmatprep.subr.mxu0 0.0
      %307 = vmatpush1.msra.mxu0 0.0
      %308 = vmatprep.subr.mxu0 0.0
      %309 = vmatpush1.msra.mxu0 0.0
      %310 = vmatprep.subr.mxu0 0.0
      %311 = vmatpush1.msra.mxu0 0.0
      %312 = vmatprep.subr.mxu0 0.0
      %313 = vmatpush1.msra.mxu0 0.0
      %314 = vmatprep.subr.mxu0 0.0
      %315 = vmatpush1.msra.mxu0 0.0
      %316 = vmatprep.subr.mxu0 0.0
      %317 = vmatpush1.msra.mxu0 0.0
      %318 = vmatprep.subr.mxu0 0.0
      %319 = vmatpush1.msra.mxu0 0.0
      %320 = vmatprep.subr.mxu0 0.0
      %321 = vmatpush1.msra.mxu0 0.0
      %322 = vmatprep.subr.mxu0 0.0
      %323 = vmatpush1.msra.mxu0 0.0
      %324 = vmatprep.subr.mxu0 0.0
      %325 = vmatpush1.msra.mxu0 0.0
      %326 = vmatprep.subr.mxu0 0.0
      %327 = vmatpush1.msra.mxu0 0.0
      %328 = vmatprep.subr.mxu0 0.0
      %329 = vmatpush1.msra.mxu0 0.0
      %330 = vmatprep.subr.mxu0 0.0
      %331 = vmatpush1.msra.mxu0 0.0
      %332 = vmatprep.subr.mxu0 0.0
      %333 = vmatpush1.msra.mxu0 0.0
      %334 = vmatprep.subr.mxu0 0.0
      %335 = vmatpush1.msra.mxu0 0.0
      %336 = vmatprep.subr.mxu0 0.0
      %337 = vmatpush1.msra.mxu0 0.0
      %338 = vmatprep.subr.mxu0 0.0
      %339 = vmatpush1.msra.mxu0 0.0
      %340 = vmatprep.subr.mxu0 0.0
      %341 = vmatpush1.msra.mxu0 0.0
      %342 = vmatprep.subr.mxu0 0.0
      %343 = vmatpush1.msra.mxu0 0.0
      %344 = vmatprep.subr.mxu0 0.0
      %345 = vmatpush1.msra.mxu0 0.0
      %346 = vmatprep.subr.mxu0 0.0
      %347 = vmatpush1.msra.mxu0 0.0
      %348 = vmatprep.subr.mxu0 0.0
      %349 = vmatpush1.msra.mxu0 0.0
      %350 = vmatprep.subr.mxu0 0.0
      %351 = vmatpush1.msra.mxu0 0.0
      %352 = vmatprep.mubr.f32.mxu0 0.0
      %353 = vmatmul.mubr.f32.gmra.mrb[0].mxu0 %v286
      %v354 = vpop.f32.mrb[0].mxu0
      %v355 = vadd.f32 %v253, %v354
      %v356 = vpop.f32.mrb[0].mxu0
      %357 = vdwg.mxu0
      %v358 = vmax.f32 %v355, 0.0
      %v359 = vld [vmem:[%s3] sm:$0xf]
      %v360 = vld [vmem:[%s4] sm:$0x1]
      %vm361 = vcmask 31744
      %v363 = vsel %vm361, %v358, 0
      %vm365 = vcmask 1043456
      %v367 = vsel %vm365, %v359, 0
      %369 = vmatprep.subr.mxu0 0.0
      %370 = vmatpush1.msra.mxu0 %v367
      %371 = vmatprep.subr.mxu0 0.0
      %372 = vmatpush1.msra.mxu0 0.0
      %373 = vmatprep.subr.mxu0 0.0
      %374 = vmatpush1.msra.mxu0 0.0
      %375 = vmatprep.subr.mxu0 0.0
      %376 = vmatpush1.msra.mxu0 0.0
      %377 = vmatprep.subr.mxu0 0.0
      %378 = vmatpush1.msra.mxu0 0.0
      %379 = vmatprep.subr.mxu0 0.0
      %380 = vmatpush1.msra.mxu0 0.0
      %381 = vmatprep.subr.mxu0 0.0
      %382 = vmatpush1.msra.mxu0 0.0
      %383 = vmatprep.subr.mxu0 0.0
      %384 = vmatpush1.msra.mxu0 0.0
      %385 = vmatprep.subr.mxu0 0.0
      %386 = vmatpush1.msra.mxu0 0.0
      %387 = vmatprep.subr.mxu0 0.0
      %388 = vmatpush1.msra.mxu0 0.0
      %389 = vmatprep.subr.mxu0 0.0
      %390 = vmatpush1.msra.mxu0 0.0
      %391 = vmatprep.subr.mxu0 0.0
      %392 = vmatpush1.msra.mxu0 0.0
      %393 = vmatprep.subr.mxu0 0.0
      %394 = vmatpush1.msra.mxu0 0.0
      %395 = vmatprep.subr.mxu0 0.0
      %396 = vmatpush1.msra.mxu0 0.0
      %397 = vmatprep.subr.mxu0 0.0
      %398 = vmatpush1.msra.mxu0 0.0
      %399 = vmatprep.subr.mxu0 0.0
      %400 = vmatpush1.msra.mxu0 0.0
      %401 = vmatprep.subr.mxu0 0.0
      %402 = vmatpush1.msra.mxu0 0.0
      %403 = vmatprep.subr.mxu0 0.0
      %404 = vmatpush1.msra.mxu0 0.0
      %405 = vmatprep.subr.mxu0 0.0
      %406 = vmatpush1.msra.mxu0 0.0
      %407 = vmatprep.subr.mxu0 0.0
      %408 = vmatpush1.msra.mxu0 0.0
      %409 = vmatprep.subr.mxu0 0.0
      %410 = vmatpush1.msra.mxu0 0.0
      %411 = vmatprep.subr.mxu0 0.0
      %412 = vmatpush1.msra.mxu0 0.0
      %413 = vmatprep.subr.mxu0 0.0
      %414 = vmatpush1.msra.mxu0 0.0
      %415 = vmatprep.subr.mxu0 0.0
      %416 = vmatpush1.msra.mxu0 0.0
      %417 = vmatprep.subr.mxu0 0.0
      %418 = vmatpush1.msra.mxu0 0.0
      %419 = vmatprep.subr.mxu0 0.0
      %420 = vmatpush1.msra.mxu0 0.0
      %421 = vmatprep.subr.mxu0 0.0
      %422 = vmatpush1.msra.mxu0 0.0
      %423 = vmatprep.subr.mxu0 0.0
      %424 = vmatpush1.msra.mxu0 0.0
      %425 = vmatprep.subr.mxu0 0.0
      %426 = vmatpush1.msra.mxu0 0.0
      %427 = vmatprep.subr.mxu0 0.0
      %428 = vmatpush1.msra.mxu0 0.0
      %429 = vmatprep.subr.mxu0 0.0
      %430 = vmatpush1.msra.mxu0 0.0
      %431 = vmatprep.subr.mxu0 0.0
      %432 = vmatpush1.msra.mxu0 0.0
      %433 = vmatprep.mubr.f32.mxu0 0.0
      %434 = vmatmul.mubr.f32.gmra.mrb[0].mxu0 %v363
      %v435 = vpop.f32.mrb[0].mxu0
      %v436 = vadd.f32 %v360, %v435
      %v437 = vpop.f32.mrb[0].mxu0
      %438 = vdwg.mxu0
      %v439 = vxor.u32 %v436, 2147483648
      %v440 = vmul.f32 %v439, 1.442695
      %v441 = vpow.pop %v440
      %v442 = vadd.f32 %v441, 1.0
      %v443 = vrcp.pop %v442
      %v444 = vmul.f32 1.0, %v443
      %v445 = vlaneseq
      %v446 = vshrl.u32 %v445, 7
      %v447 = vsub.s32 0, %v446
      %v448 = vrot.slane %v444, %v447
      %450 = vbcast.lane.b32.xlu0 %v448, 256
      %v451 = vpop.permute.xlu0 %450
      %s453 = sor.u32 256, 8
      %454 = vbcast.lane.b32.xlu0 %v448, %s453
      %v455 = vpop.permute.xlu0 %454
      %s457 = sor.u32 256, 16
      %458 = vbcast.lane.b32.xlu0 %v448, %s457
      %v459 = vpop.permute.xlu0 %458
      %s461 = sor.u32 256, 24
      %462 = vbcast.lane.b32.xlu0 %v448, %s461
      %v463 = vpop.permute.xlu0 %462
      %v464 = vmul.f32 %v225, %v451
      %v465 = vmul.f32 %v226, %v451
      %v466 = vmul.f32 %v227, %v455
      %v467 = vmul.f32 %v228, %v455
      %v468 = vmul.f32 %v229, %v459
      %v469 = vmul.f32 %v230, %v459
      %v470 = vmul.f32 %v231, %v463
      %v471 = vmul.f32 %v232, %v463
      %472 = vst [vmem:[%s224] sm:$0xff] %v464
      %473 = vst [vmem:[%s224 + $0x8] sm:$0xff] %v465
      %474 = vst [vmem:[%s224 + $0x10] sm:$0xff] %v466
      %475 = vst [vmem:[%s224 + $0x18] sm:$0xff] %v467
      %476 = vst [vmem:[%s224 + $0x20] sm:$0xff] %v468
      %477 = vst [vmem:[%s224 + $0x28] sm:$0xff] %v469
      %478 = vst [vmem:[%s224 + $0x30] sm:$0xff] %v470
      %479 = vst [vmem:[%s224 + $0x38] sm:$0xff] %v471
      %p480 = scmp.lt.s32.totalorder %s16, 1
      %s481 = scalar_select %p480, %s16, 1
      %s482 = smul.addr %s481, 8
      %s483 = smul.addr %s482, 8
      %s484 = scalar_lea.vmem %s5, %s483
      // Predicated region
      $region41: #{se_block.1} parent=39 // pred_check
        %p485 = pneg %p144
      $region42: #{se_block.1} parent=39 // pred_check_branch
        %487 = sbr.rel (%p485) target = $region44
      $region43: #{se_block.1} parent=39 // pred_region
        _
      $region44: #{se_block.1} parent=39 // pred_fallthru
        _
    $region40: #{se_block.1} parent=5 // pred_fallthru
      _
    %p488 = scmp.le.s32.totalorder 2, %s11
    // Predicated region
    $region45: #{se_block.1} parent=5 // pred_check
      %p489 = pneg %p488
    $region46: #{se_block.1} parent=5 // pred_check_branch
      %491 = sbr.rel (%p489) target = $region48
    $region47: #{se_block.1} parent=5 // pred_region
      %s492 = ssub.s32 %s11, 2
      // Predicated region
      $region49: #{se_block.1} parent=47 // pred_check
        %p493 = pneg %p150
      $region50: #{se_block.1} parent=47 // pred_check_branch
        %495 = sbr.rel (%p493) target = $region52
      $region51: #{se_block.1} parent=47 // pred_region
        %p496 = scmp.lt.s32.totalorder %s17, 1
        %s497 = scalar_select %p496, %s17, 1
        %s498 = smul.addr %s497, 8
        %s499 = smul.addr %s498, 8
        %s500 = scalar_lea.vmem %s5, %s499
      $region52: #{se_block.1} parent=47 // pred_fallthru
        _
    $region48: #{se_block.1} parent=5 // pred_fallthru
      _
  $region6: #{se_block.1} parent=0 // loop_footer
    %s15 = sadd.s32 1, %s11
  $region7: #{se_block.1} parent=0 // loop_footer_branch
    %10 = sbr.rel target = $region3
  $region8: #{se_block.1} parent=0 // loop_exit
    _

</llo_original>
